<compile_context>
chip_gen: v7x
topology: tpu7x:2x2x1
jax: 0.10.0
libtpu: 0.0.40
codegen_flags: <defaults>
</compile_context>

<pallas_src>
import math

import jax
import jax.numpy as jnp
import numpy as np
from jax import lax
from jax.experimental import pallas as pl
from jax.experimental.pallas import tpu as pltpu

# Problem sizes (small, consistent with the module's forward).
C, H, W, K = 4, 16, 16, 3          # channels, height, width, depthwise-kernel size
HW = H * W
DEG = math.pi / 180.0
NPARAM = 6 + K * K                 # per-channel scalars: p1..p5, bg^2, 9 conv taps


def lsfpom_kernel(maps_ref, params_ref, out_ref, scal_ref):
    """Fluorescence, depthwise-blurred fluorescence, and the in-kernel
    reductions (mse, ||f||_1).  All per-pixel data is (rows, H*W) lane-dense
    and all C channels are computed together via (C, 1) sublane broadcasts."""
    # ---- per-pixel maps -------------------------------------------------------
    origin = maps_ref[pl.ds(0, C), :]                       # (C, HW)
    total = maps_ref[pl.ds(C + 0, 1), :]                    # (1, HW)
    sing = jnp.minimum(maps_ref[pl.ds(C + 1, 1), :], 1.0)   # torch.minimum(coef, 1)
    doub = jnp.minimum(maps_ref[pl.ds(C + 2, 1), :], 1.0)
    a_s = maps_ref[pl.ds(C + 3, 1), :]
    a_d = maps_ref[pl.ds(C + 4, 1), :]

    total2 = total * total

    # Only 4 EUP transcendental maps (cos/sin of the channel-independent angles).
    ang_s = (2.0 * DEG) * a_s * a_s
    ang_d = (4.0 * DEG) * a_d * a_d
    c1 = jnp.cos(ang_s)
    s1 = jnp.sin(ang_s)
    c2 = jnp.cos(ang_d)
    s2 = jnp.sin(ang_d)

    s4t = 4.0 * sing * sing * total2        # 4*sing^2*total^2
    d2t = doub * doub * total2              # doub^2*total^2

    # Channel-independent basis maps, each (1, HW).
    mA = s4t * c1
    mB = s4t * s1
    mC = d2t * c2
    mD = d2t * s2

    # ---- per-channel scalar columns (C, 1) ------------------------------------
    p = params_ref[...]                     # (C, NPARAM)
    col = lambda k: p[:, k:k + 1]           # (C, 1)

    # fluorescence = total^2 * ( 4*sing^2*cosT*cos((2*a_s^2 - theta)*deg)
    #                          + doub^2*cos((4*a_d^2 - 2*theta)*deg)
    #                          + cos(2*theta*deg) + 2 )
    # expanded with angle addition; theta trig folded into p1..p5.
    f = (col(0) * mA + col(1) * mB + col(2) * mC + col(3) * mD
         + col(4) * total2)                                  # (C, HW)
    out_ref[pl.ds(0, C), :] = f

    # ---- edge masks for the 3x3 'same' depthwise conv on the flat lane axis ---
    lane = lax.broadcasted_iota(jnp.int32, (1, HW), 1)
    hh = lane >> 4               # lane // W   (W = 16)
    ww = lane & (W - 1)          # lane %  W
    h_ok = {-1: hh >= 1, 0: None, 1: hh <= H - 2}
    w_ok = {-1: ww >= 1, 0: None, 1: ww <= W - 2}

    # Depthwise (groups=C) 3x3 cross-correlation, stride 1, zero 'same' pad:
    # 9 taps = lane rolls on the whole (C, HW) slab (XLU) with edge masks,
    # per-channel weights applied as (C, 1) sublane-broadcast scalars.
    acc = None
    for di in (-1, 0, 1):
        for dj in (-1, 0, 1):
            tap = (di + 1) * K + (dj + 1)
            wgt = col(6 + tap)                            # (C, 1)
            shift = di * W + dj                           # source = f[n + shift]
            v = f if shift == 0 else pltpu.roll(f, (-shift) % HW, axis=1)
            mh, mw = h_ok[di], w_ok[dj]
            m = mh if mw is None else (mw if mh is None else jnp.logical_and(mh, mw))
            if m is not None:
                v = jnp.where(m, v, 0.0)
            contrib = wgt * v
            acc = contrib if acc is None else acc + contrib
    fb = acc + col(5)                                     # + background^2
    out_ref[pl.ds(C, C), :] = fb

    diff = fb - origin
    scal_ref[0] = jnp.sum(diff * diff)     # mse loss
    scal_ref[1] = jnp.sum(jnp.abs(f))      # ||fluorescence||_1


@jax.jit
def lsfpom_forward(origin, theta, weight, weight_decay,
                   sing, doub, sing0, doub0,
                   total, alpha_sing, alpha_doub, background):
    """Mirrors LsFPOMNet.forward().  All tensors enter in PyTorch NCHW shapes."""
    f32 = jnp.float32

    # One lane-dense VMEM slab: C origin channels first (8-sublane aligned),
    # then the 5 shared maps.  All rows are (., 256).
    maps = jnp.concatenate([
        origin.reshape(C, HW).astype(f32),
        total.reshape(1, HW).astype(f32),
        sing.reshape(1, HW).astype(f32),
        doub.reshape(1, HW).astype(f32),
        alpha_sing.reshape(1, HW).astype(f32),
        alpha_doub.reshape(1, HW).astype(f32),
    ], axis=0)                                               # (C + 5, 256)

    # Per-channel scalars precomputed by XLA (off the kernel critical path).
    th = theta.reshape(C).astype(f32) * DEG
    cT, sT = jnp.cos(th), jnp.sin(th)
    c2T, s2T = jnp.cos(2.0 * th), jnp.sin(2.0 * th)
    bg = background.reshape(C).astype(f32)
    w_flat = weight.reshape(C, K * K).astype(f32)
    params = jnp.concatenate([
        (cT * cT)[:, None], (cT * sT)[:, None],
        c2T[:, None], s2T[:, None], (c2T + 2.0)[:, None],
        (bg * bg)[:, None], w_flat,
    ], axis=1)                                               # (C, NPARAM) f32

    vmem = pl.BlockSpec(memory_space=pltpu.MemorySpace.VMEM)
    smem = pl.BlockSpec(memory_space=pltpu.MemorySpace.SMEM)
    ffb, scal = pl.pallas_call(
        lsfpom_kernel,
        out_shape=(
            jax.ShapeDtypeStruct((2 * C, HW), f32),          # [fluor; fluor_blur]
            jax.ShapeDtypeStruct((2,), f32),                 # mse, ||f||_1
        ),
        in_specs=[vmem, vmem],
        out_specs=(vmem, smem),
    )(maps, params)

    f_flat = ffb[:C]
    fb_flat = ffb[C:]
    mse = scal[0]
    l1_f = scal[1]
    # Tiny reductions kept in the wrapper (4-elem |bg| and 256-elem coef prior).
    l1_bg = jnp.sum(jnp.abs(background))
    prior = jnp.sum((sing - sing0) ** 2 + (doub - doub0) ** 2)
    risk_structural = (weight_decay[0] * l1_f
                       + weight_decay[1] * l1_bg
                       + weight_decay[2] * prior)
    loss = mse + risk_structural

    f_nchw = f_flat.reshape(1, C, H, W)
    fb_nchw = fb_flat.reshape(1, C, H, W)
    sing_c = jnp.minimum(sing, 1.0)
    doub_c = jnp.minimum(doub, 1.0)
    aux = [sing_c ** 2, doub_c ** 2, total ** 2, alpha_sing ** 2, alpha_doub ** 2,
           background ** 2, f_nchw, fb_nchw]
    return loss, aux, mse, risk_structural


def _reference_forward(origin, theta, weight, weight_decay,
                       sing, doub, sing0, doub0,
                       total, alpha_sing, alpha_doub, background):
    """Pure-JAX reference for correctness checking."""
    sing_c = jnp.minimum(sing, 1.0)
    doub_c = jnp.minimum(doub, 1.0)
    f = total ** 2 * (4.0 * sing_c ** 2 * jnp.cos(theta * DEG)
                      * jnp.cos((2.0 * alpha_sing ** 2 - theta) * DEG)
                      + doub_c ** 2 * jnp.cos(2.0 * (2.0 * alpha_doub ** 2 - theta) * DEG)
                      + jnp.cos(2.0 * theta * DEG) + 2.0)
    fb = jax.lax.conv_general_dilated(
        f, weight, window_strides=(1, 1), padding="SAME",
        feature_group_count=C) + background ** 2
    mse = jnp.sum((fb - origin) ** 2)
    reg = (weight_decay[0] * jnp.sum(jnp.abs(f))
           + weight_decay[1] * jnp.sum(jnp.abs(background))
           + weight_decay[2] * jnp.sum((sing - sing0) ** 2 + (doub - doub0) ** 2))
    return mse + reg, f, fb, mse, reg


if __name__ == "__main__":
    key = jax.random.PRNGKey(0)
    ks = jax.random.split(key, 8)

    # Deterministic synthetic parameters (shapes implied by the module's forward).
    theta = jnp.array([0.0, 45.0, 90.0, 135.0], jnp.float32).reshape(1, C, 1, 1)
    total = jax.random.uniform(ks[0], (1, 1, H, W), jnp.float32, 0.5, 1.5)
    sing = jax.random.uniform(ks[1], (1, 1, H, W), jnp.float32, 0.2, 1.2)
    doub = jax.random.uniform(ks[2], (1, 1, H, W), jnp.float32, 0.2, 1.2)
    sing0 = jnp.full((1, 1, H, W), 0.7, jnp.float32)
    doub0 = jnp.full((1, 1, H, W), 0.7, jnp.float32)
    alpha_sing = jax.random.uniform(ks[3], (1, 1, H, W), jnp.float32, 0.0, 3.0)
    alpha_doub = jax.random.uniform(ks[4], (1, 1, H, W), jnp.float32, 0.0, 3.0)
    background = 0.1 * jax.random.normal(ks[5], (1, C, 1, 1), jnp.float32)
    weight = jnp.abs(jax.random.normal(ks[6], (C, 1, K, K), jnp.float32))
    weight = weight / jnp.sum(weight, axis=(2, 3), keepdims=True)      # normalized blur PSF
    origin = jax.random.uniform(ks[7], (1, C, H, W), jnp.float32, 0.0, 4.0)
    weight_decay = jnp.array([1e-4, 1e-3, 1e-2], jnp.float32)

    out = lsfpom_forward(origin, theta, weight, weight_decay,
                         sing, doub, sing0, doub0,
                         total, alpha_sing, alpha_doub, background)
    loss, aux, mse, reg = jax.block_until_ready(out)

    # Sanity check against a pure-JAX / lax.conv reference.
    ref_loss, ref_f, ref_fb, ref_mse, ref_reg = _reference_forward(
        origin, theta, weight, weight_decay, sing, doub, sing0, doub0,
        total, alpha_sing, alpha_doub, background)
    np.testing.assert_allclose(np.asarray(aux[6]), np.asarray(ref_f), rtol=1e-4, atol=1e-4)
    np.testing.assert_allclose(np.asarray(aux[7]), np.asarray(ref_fb), rtol=1e-4, atol=1e-4)
    np.testing.assert_allclose(float(loss), float(ref_loss), rtol=1e-3)
    np.testing.assert_allclose(float(mse), float(ref_mse), rtol=1e-3)
    np.testing.assert_allclose(float(reg), float(ref_reg), rtol=1e-3)

    print("KERNEL_OK")
</pallas_src>

<mosaic_0001>
module attributes {stable_mosaic.version = 11 : i64} {
  func.func @lsfpom_kernel(%arg0: memref<9x256xf32, #tpu.memory_space<vmem>>, %arg1: memref<4x15xf32, #tpu.memory_space<vmem>>, %arg2: memref<8x256xf32, #tpu.memory_space<vmem>>, %arg3: memref<2xf32, #tpu.memory_space<smem>>) attributes {dimension_semantics = [], scalar_prefetch = 0 : i64, scratch_operands = 0 : i64, tpu.core_type = #tpu.core_type<tc>} {
    %c0 = arith.constant 0 : index
    %c0_0 = arith.constant 0 : index
    %0 = vector.load %arg0[%c0, %c0_0] : memref<9x256xf32, #tpu.memory_space<vmem>>, vector<4x256xf32>
    %c4 = arith.constant 4 : index
    %c0_1 = arith.constant 0 : index
    %1 = vector.load %arg0[%c4, %c0_1] : memref<9x256xf32, #tpu.memory_space<vmem>>, vector<1x256xf32>
    %c5 = arith.constant 5 : index
    %c0_2 = arith.constant 0 : index
    %2 = vector.load %arg0[%c5, %c0_2] : memref<9x256xf32, #tpu.memory_space<vmem>>, vector<1x256xf32>
    %cst = arith.constant 1.000000e+00 : f32
    %3 = vector.broadcast %cst : f32 to vector<1x256xf32>
    %4 = arith.minimumf %2, %3 : vector<1x256xf32>
    %c6 = arith.constant 6 : index
    %c0_3 = arith.constant 0 : index
    %5 = vector.load %arg0[%c6, %c0_3] : memref<9x256xf32, #tpu.memory_space<vmem>>, vector<1x256xf32>
    %cst_4 = arith.constant 1.000000e+00 : f32
    %6 = vector.broadcast %cst_4 : f32 to vector<1x256xf32>
    %7 = arith.minimumf %5, %6 : vector<1x256xf32>
    %c7 = arith.constant 7 : index
    %c0_5 = arith.constant 0 : index
    %8 = vector.load %arg0[%c7, %c0_5] : memref<9x256xf32, #tpu.memory_space<vmem>>, vector<1x256xf32>
    %c8 = arith.constant 8 : index
    %c0_6 = arith.constant 0 : index
    %9 = vector.load %arg0[%c8, %c0_6] : memref<9x256xf32, #tpu.memory_space<vmem>>, vector<1x256xf32>
    %10 = arith.mulf %1, %1 : vector<1x256xf32>
    %cst_7 = arith.constant 0.0349065848 : f32
    %11 = vector.broadcast %cst_7 : f32 to vector<1x256xf32>
    %12 = arith.mulf %11, %8 : vector<1x256xf32>
    %13 = arith.mulf %12, %8 : vector<1x256xf32>
    %cst_8 = arith.constant 0.0698131695 : f32
    %14 = vector.broadcast %cst_8 : f32 to vector<1x256xf32>
    %15 = arith.mulf %14, %9 : vector<1x256xf32>
    %16 = arith.mulf %15, %9 : vector<1x256xf32>
    %17 = math.cos %13 : vector<1x256xf32>
    %18 = math.sin %13 : vector<1x256xf32>
    %19 = math.cos %16 : vector<1x256xf32>
    %20 = math.sin %16 : vector<1x256xf32>
    %cst_9 = arith.constant 4.000000e+00 : f32
    %21 = vector.broadcast %cst_9 : f32 to vector<1x256xf32>
    %22 = arith.mulf %21, %4 : vector<1x256xf32>
    %23 = arith.mulf %22, %4 : vector<1x256xf32>
    %24 = arith.mulf %23, %10 : vector<1x256xf32>
    %25 = arith.mulf %7, %7 : vector<1x256xf32>
    %26 = arith.mulf %25, %10 : vector<1x256xf32>
    %27 = arith.mulf %24, %17 : vector<1x256xf32>
    %28 = arith.mulf %24, %18 : vector<1x256xf32>
    %29 = arith.mulf %26, %19 : vector<1x256xf32>
    %30 = arith.mulf %26, %20 : vector<1x256xf32>
    %c0_10 = arith.constant 0 : index
    %c0_11 = arith.constant 0 : index
    %31 = vector.load %arg1[%c0_10, %c0_11] : memref<4x15xf32, #tpu.memory_space<vmem>>, vector<4x15xf32>
    %32 = vector.extract_strided_slice %31 {offsets = [0, 0], sizes = [4, 1], strides = [1, 1]} : vector<4x15xf32> to vector<4x1xf32>
    %33 = vector.broadcast %32 : vector<4x1xf32> to vector<4x256xf32>
    %34 = vector.broadcast %27 : vector<1x256xf32> to vector<4x256xf32>
    %35 = arith.mulf %33, %34 : vector<4x256xf32>
    %36 = vector.extract_strided_slice %31 {offsets = [0, 1], sizes = [4, 1], strides = [1, 1]} : vector<4x15xf32> to vector<4x1xf32>
    %37 = vector.broadcast %36 : vector<4x1xf32> to vector<4x256xf32>
    %38 = vector.broadcast %28 : vector<1x256xf32> to vector<4x256xf32>
    %39 = arith.mulf %37, %38 : vector<4x256xf32>
    %40 = arith.addf %35, %39 : vector<4x256xf32>
    %41 = vector.extract_strided_slice %31 {offsets = [0, 2], sizes = [4, 1], strides = [1, 1]} : vector<4x15xf32> to vector<4x1xf32>
    %42 = vector.broadcast %41 : vector<4x1xf32> to vector<4x256xf32>
    %43 = vector.broadcast %29 : vector<1x256xf32> to vector<4x256xf32>
    %44 = arith.mulf %42, %43 : vector<4x256xf32>
    %45 = arith.addf %40, %44 : vector<4x256xf32>
    %46 = vector.extract_strided_slice %31 {offsets = [0, 3], sizes = [4, 1], strides = [1, 1]} : vector<4x15xf32> to vector<4x1xf32>
    %47 = vector.broadcast %46 : vector<4x1xf32> to vector<4x256xf32>
    %48 = vector.broadcast %30 : vector<1x256xf32> to vector<4x256xf32>
    %49 = arith.mulf %47, %48 : vector<4x256xf32>
    %50 = arith.addf %45, %49 : vector<4x256xf32>
    %51 = vector.extract_strided_slice %31 {offsets = [0, 4], sizes = [4, 1], strides = [1, 1]} : vector<4x15xf32> to vector<4x1xf32>
    %52 = vector.broadcast %51 : vector<4x1xf32> to vector<4x256xf32>
    %53 = vector.broadcast %10 : vector<1x256xf32> to vector<4x256xf32>
    %54 = arith.mulf %52, %53 : vector<4x256xf32>
    %55 = arith.addf %50, %54 : vector<4x256xf32>
    %c0_12 = arith.constant 0 : index
    %c0_13 = arith.constant 0 : index
    %56 = vector.load %arg2[%c0_12, %c0_13] : memref<8x256xf32, #tpu.memory_space<vmem>>, vector<4x256xf32>
    tpu.vector_store %arg2[%c0_12, %c0_13], %55 {strides = array<i32>} : memref<8x256xf32, #tpu.memory_space<vmem>>, vector<4x256xf32>,
    %57 = tpu.iota {dimensions = array<i32: 1>} : vector<1x256xi32>
    %c4_i32 = arith.constant 4 : i32
    %58 = vector.broadcast %c4_i32 : i32 to vector<1x256xi32>
    %59 = arith.shrsi %57, %58 : vector<1x256xi32>
    %c15_i32 = arith.constant 15 : i32
    %60 = vector.broadcast %c15_i32 : i32 to vector<1x256xi32>
    %61 = arith.andi %57, %60 : vector<1x256xi32>
    %c1_i32 = arith.constant 1 : i32
    %62 = vector.broadcast %c1_i32 : i32 to vector<1x256xi32>
    %63 = arith.cmpi sge, %59, %62 : vector<1x256xi32>
    %c14_i32 = arith.constant 14 : i32
    %64 = vector.broadcast %c14_i32 : i32 to vector<1x256xi32>
    %65 = arith.cmpi sle, %59, %64 : vector<1x256xi32>
    %c1_i32_14 = arith.constant 1 : i32
    %66 = vector.broadcast %c1_i32_14 : i32 to vector<1x256xi32>
    %67 = arith.cmpi sge, %61, %66 : vector<1x256xi32>
    %c14_i32_15 = arith.constant 14 : i32
    %68 = vector.broadcast %c14_i32_15 : i32 to vector<1x256xi32>
    %69 = arith.cmpi sle, %61, %68 : vector<1x256xi32>
    %70 = vector.extract_strided_slice %31 {offsets = [0, 6], sizes = [4, 1], strides = [1, 1]} : vector<4x15xf32> to vector<4x1xf32>
    %c17_i32 = arith.constant 17 : i32
    %71 = tpu.dynamic_rotate %55 by %c17_i32 dim 1 : vector<4x256xf32>, i32 -> vector<4x256xf32>
    %72 = arith.andi %63, %67 : vector<1x256xi1>
    %cst_16 = arith.constant 0.000000e+00 : f32
    %73 = vector.shape_cast %72 : vector<1x256xi1> to vector<1x256xi1>
    %74 = vector.broadcast %73 : vector<1x256xi1> to vector<4x256xi1>
    %75 = vector.broadcast %cst_16 : f32 to vector<4x256xf32>
    %76 = arith.select %74, %71, %75 : vector<4x256xi1>, vector<4x256xf32>
    %77 = vector.broadcast %70 : vector<4x1xf32> to vector<4x256xf32>
    %78 = arith.mulf %77, %76 : vector<4x256xf32>
    %79 = vector.extract_strided_slice %31 {offsets = [0, 7], sizes = [4, 1], strides = [1, 1]} : vector<4x15xf32> to vector<4x1xf32>
    %c16_i32 = arith.constant 16 : i32
    %80 = tpu.dynamic_rotate %55 by %c16_i32 dim 1 : vector<4x256xf32>, i32 -> vector<4x256xf32>
    %cst_17 = arith.constant 0.000000e+00 : f32
    %81 = vector.shape_cast %63 : vector<1x256xi1> to vector<1x256xi1>
    %82 = vector.broadcast %81 : vector<1x256xi1> to vector<4x256xi1>
    %83 = vector.broadcast %cst_17 : f32 to vector<4x256xf32>
    %84 = arith.select %82, %80, %83 : vector<4x256xi1>, vector<4x256xf32>
    %85 = vector.broadcast %79 : vector<4x1xf32> to vector<4x256xf32>
    %86 = arith.mulf %85, %84 : vector<4x256xf32>
    %87 = arith.addf %78, %86 : vector<4x256xf32>
    %88 = vector.extract_strided_slice %31 {offsets = [0, 8], sizes = [4, 1], strides = [1, 1]} : vector<4x15xf32> to vector<4x1xf32>
    %c15_i32_18 = arith.constant 15 : i32
    %89 = tpu.dynamic_rotate %55 by %c15_i32_18 dim 1 : vector<4x256xf32>, i32 -> vector<4x256xf32>
    %90 = arith.andi %63, %69 : vector<1x256xi1>
    %cst_19 = arith.constant 0.000000e+00 : f32
    %91 = vector.shape_cast %90 : vector<1x256xi1> to vector<1x256xi1>
    %92 = vector.broadcast %91 : vector<1x256xi1> to vector<4x256xi1>
    %93 = vector.broadcast %cst_19 : f32 to vector<4x256xf32>
    %94 = arith.select %92, %89, %93 : vector<4x256xi1>, vector<4x256xf32>
    %95 = vector.broadcast %88 : vector<4x1xf32> to vector<4x256xf32>
    %96 = arith.mulf %95, %94 : vector<4x256xf32>
    %97 = arith.addf %87, %96 : vector<4x256xf32>
    %98 = vector.extract_strided_slice %31 {offsets = [0, 9], sizes = [4, 1], strides = [1, 1]} : vector<4x15xf32> to vector<4x1xf32>
    %c1_i32_20 = arith.constant 1 : i32
    %99 = tpu.dynamic_rotate %55 by %c1_i32_20 dim 1 : vector<4x256xf32>, i32 -> vector<4x256xf32>
    %cst_21 = arith.constant 0.000000e+00 : f32
    %100 = vector.shape_cast %67 : vector<1x256xi1> to vector<1x256xi1>
    %101 = vector.broadcast %100 : vector<1x256xi1> to vector<4x256xi1>
    %102 = vector.broadcast %cst_21 : f32 to vector<4x256xf32>
    %103 = arith.select %101, %99, %102 : vector<4x256xi1>, vector<4x256xf32>
    %104 = vector.broadcast %98 : vector<4x1xf32> to vector<4x256xf32>
    %105 = arith.mulf %104, %103 : vector<4x256xf32>
    %106 = arith.addf %97, %105 : vector<4x256xf32>
    %107 = vector.extract_strided_slice %31 {offsets = [0, 10], sizes = [4, 1], strides = [1, 1]} : vector<4x15xf32> to vector<4x1xf32>
    %108 = vector.broadcast %107 : vector<4x1xf32> to vector<4x256xf32>
    %109 = arith.mulf %108, %55 : vector<4x256xf32>
    %110 = arith.addf %106, %109 : vector<4x256xf32>
    %111 = vector.extract_strided_slice %31 {offsets = [0, 11], sizes = [4, 1], strides = [1, 1]} : vector<4x15xf32> to vector<4x1xf32>
    %c255_i32 = arith.constant 255 : i32
    %112 = tpu.dynamic_rotate %55 by %c255_i32 dim 1 : vector<4x256xf32>, i32 -> vector<4x256xf32>
    %cst_22 = arith.constant 0.000000e+00 : f32
    %113 = vector.shape_cast %69 : vector<1x256xi1> to vector<1x256xi1>
    %114 = vector.broadcast %113 : vector<1x256xi1> to vector<4x256xi1>
    %115 = vector.broadcast %cst_22 : f32 to vector<4x256xf32>
    %116 = arith.select %114, %112, %115 : vector<4x256xi1>, vector<4x256xf32>
    %117 = vector.broadcast %111 : vector<4x1xf32> to vector<4x256xf32>
    %118 = arith.mulf %117, %116 : vector<4x256xf32>
    %119 = arith.addf %110, %118 : vector<4x256xf32>
    %120 = vector.extract_strided_slice %31 {offsets = [0, 12], sizes = [4, 1], strides = [1, 1]} : vector<4x15xf32> to vector<4x1xf32>
    %c241_i32 = arith.constant 241 : i32
    %121 = tpu.dynamic_rotate %55 by %c241_i32 dim 1 : vector<4x256xf32>, i32 -> vector<4x256xf32>
    %122 = arith.andi %65, %67 : vector<1x256xi1>
    %cst_23 = arith.constant 0.000000e+00 : f32
    %123 = vector.shape_cast %122 : vector<1x256xi1> to vector<1x256xi1>
    %124 = vector.broadcast %123 : vector<1x256xi1> to vector<4x256xi1>
    %125 = vector.broadcast %cst_23 : f32 to vector<4x256xf32>
    %126 = arith.select %124, %121, %125 : vector<4x256xi1>, vector<4x256xf32>
    %127 = vector.broadcast %120 : vector<4x1xf32> to vector<4x256xf32>
    %128 = arith.mulf %127, %126 : vector<4x256xf32>
    %129 = arith.addf %119, %128 : vector<4x256xf32>
    %130 = vector.extract_strided_slice %31 {offsets = [0, 13], sizes = [4, 1], strides = [1, 1]} : vector<4x15xf32> to vector<4x1xf32>
    %c240_i32 = arith.constant 240 : i32
    %131 = tpu.dynamic_rotate %55 by %c240_i32 dim 1 : vector<4x256xf32>, i32 -> vector<4x256xf32>
    %cst_24 = arith.constant 0.000000e+00 : f32
    %132 = vector.shape_cast %65 : vector<1x256xi1> to vector<1x256xi1>
    %133 = vector.broadcast %132 : vector<1x256xi1> to vector<4x256xi1>
    %134 = vector.broadcast %cst_24 : f32 to vector<4x256xf32>
    %135 = arith.select %133, %131, %134 : vector<4x256xi1>, vector<4x256xf32>
    %136 = vector.broadcast %130 : vector<4x1xf32> to vector<4x256xf32>
    %137 = arith.mulf %136, %135 : vector<4x256xf32>
    %138 = arith.addf %129, %137 : vector<4x256xf32>
    %139 = vector.extract_strided_slice %31 {offsets = [0, 14], sizes = [4, 1], strides = [1, 1]} : vector<4x15xf32> to vector<4x1xf32>
    %c239_i32 = arith.constant 239 : i32
    %140 = tpu.dynamic_rotate %55 by %c239_i32 dim 1 : vector<4x256xf32>, i32 -> vector<4x256xf32>
    %141 = arith.andi %65, %69 : vector<1x256xi1>
    %cst_25 = arith.constant 0.000000e+00 : f32
    %142 = vector.shape_cast %141 : vector<1x256xi1> to vector<1x256xi1>
    %143 = vector.broadcast %142 : vector<1x256xi1> to vector<4x256xi1>
    %144 = vector.broadcast %cst_25 : f32 to vector<4x256xf32>
    %145 = arith.select %143, %140, %144 : vector<4x256xi1>, vector<4x256xf32>
    %146 = vector.broadcast %139 : vector<4x1xf32> to vector<4x256xf32>
    %147 = arith.mulf %146, %145 : vector<4x256xf32>
    %148 = arith.addf %138, %147 : vector<4x256xf32>
    %149 = vector.extract_strided_slice %31 {offsets = [0, 5], sizes = [4, 1], strides = [1, 1]} : vector<4x15xf32> to vector<4x1xf32>
    %150 = vector.broadcast %149 : vector<4x1xf32> to vector<4x256xf32>
    %151 = arith.addf %148, %150 : vector<4x256xf32>
    %c4_26 = arith.constant 4 : index
    %c0_27 = arith.constant 0 : index
    %152 = vector.load %arg2[%c4_26, %c0_27] : memref<8x256xf32, #tpu.memory_space<vmem>>, vector<4x256xf32>
    tpu.vector_store %arg2[%c4_26, %c0_27], %151 {strides = array<i32>} : memref<8x256xf32, #tpu.memory_space<vmem>>, vector<4x256xf32>,
    %153 = arith.subf %151, %0 : vector<4x256xf32>
    %154 = arith.mulf %153, %153 : vector<4x256xf32>
    %155 = vector.shape_cast %154 : vector<4x256xf32> to vector<1x4x256xf32>
    %cst_28 = arith.constant dense<0.000000e+00> : vector<1xf32>
    %156 = vector.multi_reduction <add>, %155, %cst_28 [1, 2] : vector<1x4x256xf32> to vector<1xf32>
    %157 = vector.shape_cast %156 : vector<1xf32> to vector<1x1x1xf32>
    %158 = vector.extract %157[0, 0, 0] : f32 from vector<1x1x1xf32>
    %c0_29 = arith.constant 0 : index
    %159 = memref.load %arg3[%c0_29] : memref<2xf32, #tpu.memory_space<smem>>
    memref.store %158, %arg3[%c0_29] : memref<2xf32, #tpu.memory_space<smem>>
    %160 = math.absf %55 : vector<4x256xf32>
    %161 = vector.shape_cast %160 : vector<4x256xf32> to vector<1x4x256xf32>
    %cst_30 = arith.constant dense<0.000000e+00> : vector<1xf32>
    %162 = vector.multi_reduction <add>, %161, %cst_30 [1, 2] : vector<1x4x256xf32> to vector<1xf32>
    %163 = vector.shape_cast %162 : vector<1xf32> to vector<1x1x1xf32>
    %164 = vector.extract %163[0, 0, 0] : f32 from vector<1x1x1xf32>
    %c1 = arith.constant 1 : index
    %165 = memref.load %arg3[%c1] : memref<2xf32, #tpu.memory_space<smem>>
    memref.store %164, %arg3[%c1] : memref<2xf32, #tpu.memory_space<smem>>
    return
  }
}

</mosaic_0001>

<llo_original>
// kernel: integer_pow.12
$region0: #{integer_pow.12}
  #allocation2 [shape = 's32[1]{0}', space=sflag, size = 0x4, scoped, tag = 'scoped memory for integer_pow.12']
  %s0 = inlined_call_operand.vmem [shape: f32[1,1,16,16], index: 0, kind: input, shape index: {}, may-alias: {0,1}]
  %s1 = inlined_call_operand.vmem [shape: f32[1,1,16,16], index: 1, kind: input, shape index: {}, may-alias: {0,1}]
  %s2 = inlined_call_operand.hbm [shape: f32[1,1,16,16], index: 2, kind: output, shape index: {}]
  $region1: #{integer_pow.12} parent=0
    #allocation0 [shape = 'u8[8192]{0}', space=vmem, size = 0x2000, scoped, tag = 'operand span for operand 2']
    #allocation1 [shape = 's32[1]{0}', space=sflag, size = 0x4, scoped, tag = 'scoped memory for integer_pow.12']
    %3 = vsyncpa [#allocation1], 0
    %v4 = vld [vmem:[%s0] sm:$0xff]
    %v5 = vld [vmem:[%s1] sm:$0xff]
    %6 = xla_tuple %v4, %v5
    %7 = xla_tuple %6
    %v8 = vmul.f32 %v4, %v5
    %9 = xla_tuple %v8
    %10 = vst [vmem:[#allocation0] sm:$0xff] %v8
    %s11 = scalar_lea.vmem %s0, 8
    %v12 = vld [vmem:[%s11] sm:$0xff]
    %s13 = scalar_lea.vmem %s1, 8
    %v14 = vld [vmem:[%s13] sm:$0xff]
    %15 = xla_tuple %v12, %v14
    %16 = xla_tuple %15
    %v17 = vmul.f32 %v12, %v14
    %18 = xla_tuple %v17
    %s19 = scalar_lea.vmem [#allocation0], 8
    %20 = vst [vmem:[%s19] sm:$0xff] %v17
    %s22 = ssub.s32 256, 256
    %23 = vsyncadd [#allocation1], %s22
    %s24 = sshll.u32 [#allocation0], 4
    %s25 = int_to_ptr.vmem [resolvable:$true] %s24
    %30 = dma.vmem_to_hbm [thread:$0]  %s25, 256, %s2, [#allocation1], 128, 128, 8
    %31 = dma.done [#allocation1], 256
    %32 = vsyncpa [#allocation1], 1

// kernel: lsfpom_forward.1
$region0: #{lsfpom_forward.1}
  #allocation0 [shape = 'u32[]', space=smem, size = 0x4, offset = 0x4, fixed_abs, tag = 'smem constant byte address 0x4 - core index']
  #allocation1 [shape = 'u32[144,128]{1,0:T(1,128)}', space=vmem, size = 0x12000, scoped, tag = 'internal scratch']
  %s0 = inlined_call_operand.vmem [shape: f32[9,256], index: 0, kind: input, shape index: {}]
  %s1 = inlined_call_operand.vmem [shape: f32[4,15], index: 1, kind: input, shape index: {}]
  %s2 = inlined_call_operand.vmem [shape: f32[8,256], index: 2, kind: output, shape index: {0}]
  %s3 = inlined_call_operand.vmem [shape: f32[2], index: 3, kind: output, shape index: {1}]
  %4 = xla_tuple %s2, %s3
  %s5 = sld [smem:[#allocation0]]
  $region26: #{lsfpom_forward.1} parent=0
    _
  %s7 = ssub.s32 1, %s5
  %s8 = scalar_select 0, %s7, %s5
  $region1: #{lsfpom_forward.1} parent=0
    #allocation2 [shape = 'u8[512]{0}', space=smem, size = 0x200, scoped, tag = 'output window, operand 1, single buffered']
    #allocation3 [shape = 's32[1]{0}', space=sflag, size = 0x4, scoped, tag = 'scoped memory for lsfpom_forward.1']
    %9 = vsyncpa [#allocation3], 0
    // Predicated region
    $region2: #{lsfpom_forward.1} parent=1 // pred_check
      _
    $region3: #{lsfpom_forward.1} parent=1 // pred_check_branch
      %11 = sbr.rel (0) target = $region5
    $region4: #{lsfpom_forward.1} parent=1 // pred_region
      _
    $region5: #{lsfpom_forward.1} parent=1 // pred_fallthru
      _
    // Predicated region
    $region6: #{lsfpom_forward.1} parent=1 // pred_check
      _
    $region7: #{lsfpom_forward.1} parent=1 // pred_check_branch
      %13 = sbr.rel (0) target = $region9
    $region8: #{lsfpom_forward.1} parent=1 // pred_region
      _
    $region9: #{lsfpom_forward.1} parent=1 // pred_fallthru
      _
    %v14 = vld [vmem:[%s0] sm:$0xf]
    %v15 = vld [vmem:[%s0 + $0x8] sm:$0xf]
    %s16 = scalar_lea.vmem %s0, 4
    %v17 = vld [vmem:[%s16] ss:$8 sm:$0x3]
    %s18 = scalar_lea.vmem %s0, 5
    %v19 = vld [vmem:[%s18] ss:$8 sm:$0x3]
    %v20 = vmin.f32 %v19, 1.0
    %s21 = scalar_lea.vmem %s0, 6
    %v22 = vld [vmem:[%s21] ss:$8 sm:$0x3]
    %v23 = vmin.f32 %v22, 1.0
    %s24 = scalar_lea.vmem %s0, 7
    %v25 = vld [vmem:[%s24] ss:$8 sm:$0x3]
    %s26 = scalar_lea.vmem %s0, 16
    %v27 = vld [vmem:[%s26] ss:$8 sm:$0x3]
    %v28 = vmul.f32 %v17, %v17
    %v29 = vmul.f32 %v25, 0.034906585
    %v30 = vmul.f32 %v29, %v25
    %v31 = vmul.f32 %v27, 0.06981317
    %v32 = vmul.f32 %v31, %v27
    %v33 = vand.u32 2147483647, %v30
    %vm34 = vcmp.le.f32.partialorder %v33, 0.7853982
    %vm35 = vcmp.lt.s32.totalorder %v30, 0
    %v36 = vand.u32 %v30, 2139095040
    %v37 = vshrl.u32 %v36, 23
    %v38 = vsub.s32 %v37, 127
    %v39 = vand.u32 2147483647, %v30
    %v40 = vand.u32 %v39, 8388607
    %v41 = vor.u32 %v40, 8388608
    %v42 = vsub.s32 0, %v41
    %v43 = vadd.s32 %v38, 1
    %vm44 = vcmp.gt.s32.totalorder %v43, 0
    %v45 = vsel %vm44, %v43, 0
    %v46 = vshrl.u32 %v45, 5
    %v47 = vand.u32 %v45, 31
    %v48 = vsub.s32 32, %v47
    %v49 = vshrl.u32 683565275, %v48
    %v50 = vshll.u32 683565275, %v47
    %v51 = vshrl.u32 2475754826, %v48
    %v52 = vor.u32 %v50, %v51
    %v53 = vshll.u32 2475754826, %v47
    %v54 = vshrl.u32 2131351028, %v48
    %v55 = vor.u32 %v53, %v54
    %v56 = vshll.u32 2131351028, %v47
    %v57 = vshrl.u32 2102212464, %v48
    %v58 = vor.u32 %v56, %v57
    %v59 = vshll.u32 2102212464, %v47
    %v60 = vshrl.u32 920167782, %v48
    %v61 = vor.u32 %v59, %v60
    %v62 = vshll.u32 920167782, %v47
    %v63 = vshrl.u32 1326507024, %v48
    %v64 = vor.u32 %v62, %v63
    %vm65 = vcmp.lt.s32.totalorder %v46, 1
    %vm66 = vcmp.lt.s32.totalorder %v46, 2
    %vm67 = vcmp.lt.s32.totalorder %v46, 3
    %vm68 = vcmp.lt.s32.totalorder %v46, 4
    %v69 = vsel %vm65, %v49, %v52
    %v70 = vsel %vm68, %v58, 2102212464
    %v71 = vsel %vm67, %v55, %v70
    %v72 = vsel %vm66, %v69, %v71
    %v73 = vsel %vm65, %v52, %v55
    %v74 = vsel %vm68, %v61, 920167782
    %v75 = vsel %vm67, %v58, %v74
    %v76 = vsel %vm66, %v73, %v75
    %v77 = vsel %vm65, %v55, %v58
    %v78 = vsel %vm68, %v64, 1326507024
    %v79 = vsel %vm67, %v61, %v78
    %v80 = vsel %vm66, %v77, %v79
    %v81 = vshll.u32 %v41, 8
    %v82 = vmul.u32.u64.compose %v81, %v80
    %v83 = vextract.low.u32 %v82
    %v84 = vextract.high.u32 %v82
    %v85 = vmul.u32.u64.compose %v81, %v76
    %v86 = vextract.low.u32 %v85
    %v87 = vextract.high.u32 %v85
    %v88 = vmul.u32 %v81, %v72
    %v89 = vadd.s32 %v84, %v86
    %vm90 = vc.u32 %v84, %v86
    %v91 = vadd.s32 %v87, 1
    %v92 = vsel %vm90, %v91, %v87
    %v93 = vadd.s32 %v88, %v92
    %v94 = vadd.s32 %v93, 536870912
    %v95 = vshrl.u32 %v94, 30
    %v96 = vshll.u32 %v95, 30
    %v97 = vsub.s32 %v93, %v96
    %vm98 = vcmp.lt.s32.totalorder %v97, 0
    %v99 = vsub.s32 0, %v97
    %v100 = vsel %vm98, %v99, %v97
    %v101 = vclz %v100
    %v102 = vsub.s32 %v101, 2
    %vm103 = vcmp.gt.s32.totalorder 0, %v102
    %v104 = vsel %vm103, 0, %v102
    %v105 = vsub.s32 32, %v104
    %v106 = vshll.u32 %v97, %v104
    %v107 = vshrl.u32 %v89, %v105
    %v108 = vor.u32 %v106, %v107
    %v109 = vsub.s32 4294967266, %v104
    %v110 = vadd.s32 %v109, 127
    %v111 = vshll.u32 %v110, 23
    %v112 = vor.u32 4788187, %v111
    %v113 = vand.u32 2147483647, %v112
    %v115 = vcvt.s32.f32 %v108
    %v116 = vmul.f32 %v115, %v113
    %v117 = vxor.u32 %v116, 2147483648
    %v118 = vsel %vm35, %v117, %v116
    %v119 = vsub.s32 4, %v95
    %v120 = vsel %vm35, %v119, %v95
    %v121 = vsel %vm34, %v30, %v118
    %v122 = vsel %vm34, 0, %v120
    %v123 = vcosq.f32.pop %v121
    %v124 = vsinq.f32.pop %v121
    %vm125 = vweird.f32 %v30
    %v126 = vand.u32 %v122, 3
    %vm127 = vcmp.lt.s32.totalorder %v126, 2
    %vm128 = vcmp.eq.s32.totalorder %v126, 0
    %v129 = vxor.u32 %v124, 2147483648
    %v130 = vsel %vm128, %v123, %v129
    %vm131 = vcmp.eq.s32.totalorder %v126, 2
    %v132 = vxor.u32 %v123, 2147483648
    %v133 = vsel %vm131, %v132, %v124
    %v134 = vsel %vm127, %v130, %v133
    %v135 = vsel %vm125, nan, %v134
    %v136 = vand.u32 2147483647, %v30
    %vm137 = vcmp.le.f32.partialorder %v136, 0.7853982
    %vm138 = vcmp.lt.s32.totalorder %v30, 0
    %v139 = vand.u32 %v30, 2139095040
    %v140 = vshrl.u32 %v139, 23
    %v141 = vsub.s32 %v140, 127
    %v142 = vand.u32 2147483647, %v30
    %v143 = vand.u32 %v142, 8388607
    %v144 = vor.u32 %v143, 8388608
    %v145 = vsub.s32 0, %v144
    %v146 = vadd.s32 %v141, 1
    %vm147 = vcmp.gt.s32.totalorder %v146, 0
    %v148 = vsel %vm147, %v146, 0
    %v149 = vshrl.u32 %v148, 5
    %v150 = vand.u32 %v148, 31
    %v151 = vsub.s32 32, %v150
    %v152 = vshrl.u32 683565275, %v151
    %v153 = vshll.u32 683565275, %v150
    %v154 = vshrl.u32 2475754826, %v151
    %v155 = vor.u32 %v153, %v154
    %v156 = vshll.u32 2475754826, %v150
    %v157 = vshrl.u32 2131351028, %v151
    %v158 = vor.u32 %v156, %v157
    %v159 = vshll.u32 2131351028, %v150
    %v160 = vshrl.u32 2102212464, %v151
    %v161 = vor.u32 %v159, %v160
    %v162 = vshll.u32 2102212464, %v150
    %v163 = vshrl.u32 920167782, %v151
    %v164 = vor.u32 %v162, %v163
    %v165 = vshll.u32 920167782, %v150
    %v166 = vshrl.u32 1326507024, %v151
    %v167 = vor.u32 %v165, %v166
    %vm168 = vcmp.lt.s32.totalorder %v149, 1
    %vm169 = vcmp.lt.s32.totalorder %v149, 2
    %vm170 = vcmp.lt.s32.totalorder %v149, 3
    %vm171 = vcmp.lt.s32.totalorder %v149, 4
    %v172 = vsel %vm168, %v152, %v155
    %v173 = vsel %vm171, %v161, 2102212464
    %v174 = vsel %vm170, %v158, %v173
    %v175 = vsel %vm169, %v172, %v174
    %v176 = vsel %vm168, %v155, %v158
    %v177 = vsel %vm171, %v164, 920167782
    %v178 = vsel %vm170, %v161, %v177
    %v179 = vsel %vm169, %v176, %v178
    %v180 = vsel %vm168, %v158, %v161
    %v181 = vsel %vm171, %v167, 1326507024
    %v182 = vsel %vm170, %v164, %v181
    %v183 = vsel %vm169, %v180, %v182
    %v184 = vshll.u32 %v144, 8
    %v185 = vmul.u32.u64.compose %v184, %v183
    %v186 = vextract.low.u32 %v185
    %v187 = vextract.high.u32 %v185
    %v188 = vmul.u32.u64.compose %v184, %v179
    %v189 = vextract.low.u32 %v188
    %v190 = vextract.high.u32 %v188
    %v191 = vmul.u32 %v184, %v175
    %v192 = vadd.s32 %v187, %v189
    %vm193 = vc.u32 %v187, %v189
    %v194 = vadd.s32 %v190, 1
    %v195 = vsel %vm193, %v194, %v190
    %v196 = vadd.s32 %v191, %v195
    %v197 = vadd.s32 %v196, 536870912
    %v198 = vshrl.u32 %v197, 30
    %v199 = vshll.u32 %v198, 30
    %v200 = vsub.s32 %v196, %v199
    %vm201 = vcmp.lt.s32.totalorder %v200, 0
    %v202 = vsub.s32 0, %v200
    %v203 = vsel %vm201, %v202, %v200
    %v204 = vclz %v203
    %v205 = vsub.s32 %v204, 2
    %vm206 = vcmp.gt.s32.totalorder 0, %v205
    %v207 = vsel %vm206, 0, %v205
    %v208 = vsub.s32 32, %v207
    %v209 = vshll.u32 %v200, %v207
    %v210 = vshrl.u32 %v192, %v208
    %v211 = vor.u32 %v209, %v210
    %v212 = vsub.s32 4294967266, %v207
    %v213 = vadd.s32 %v212, 127
    %v214 = vshll.u32 %v213, 23
    %v215 = vor.u32 4788187, %v214
    %v216 = vand.u32 2147483647, %v215
    %v218 = vcvt.s32.f32 %v211
    %v219 = vmul.f32 %v218, %v216
    %v220 = vxor.u32 %v219, 2147483648
    %v221 = vsel %vm138, %v220, %v219
    %v222 = vsub.s32 4, %v198
    %v223 = vsel %vm138, %v222, %v198
    %v224 = vsel %vm137, %v30, %v221
    %v225 = vsel %vm137, 0, %v223
    %v226 = vcosq.f32.pop %v224
    %v227 = vsinq.f32.pop %v224
    %vm228 = vweird.f32 %v30
    %v229 = vadd.s32 %v225, 3
    %v230 = vand.u32 %v229, 3
    %vm231 = vcmp.lt.s32.totalorder %v230, 2
    %vm232 = vcmp.eq.s32.totalorder %v230, 0
    %v233 = vxor.u32 %v227, 2147483648
    %v234 = vsel %vm232, %v226, %v233
    %vm235 = vcmp.eq.s32.totalorder %v230, 2
    %v236 = vxor.u32 %v226, 2147483648
    %v237 = vsel %vm235, %v236, %v227
    %v238 = vsel %vm231, %v234, %v237
    %v239 = vsel %vm228, nan, %v238
    %v240 = vand.u32 2147483647, %v32
    %vm241 = vcmp.le.f32.partialorder %v240, 0.7853982
    %vm242 = vcmp.lt.s32.totalorder %v32, 0
    %v243 = vand.u32 %v32, 2139095040
    %v244 = vshrl.u32 %v243, 23
    %v245 = vsub.s32 %v244, 127
    %v246 = vand.u32 2147483647, %v32
    %v247 = vand.u32 %v246, 8388607
    %v248 = vor.u32 %v247, 8388608
    %v249 = vsub.s32 0, %v248
    %v250 = vadd.s32 %v245, 1
    %vm251 = vcmp.gt.s32.totalorder %v250, 0
    %v252 = vsel %vm251, %v250, 0
    %v253 = vshrl.u32 %v252, 5
    %v254 = vand.u32 %v252, 31
    %v255 = vsub.s32 32, %v254
    %v256 = vshrl.u32 683565275, %v255
    %v257 = vshll.u32 683565275, %v254
    %v258 = vshrl.u32 2475754826, %v255
    %v259 = vor.u32 %v257, %v258
    %v260 = vshll.u32 2475754826, %v254
    %v261 = vshrl.u32 2131351028, %v255
    %v262 = vor.u32 %v260, %v261
    %v263 = vshll.u32 2131351028, %v254
    %v264 = vshrl.u32 2102212464, %v255
    %v265 = vor.u32 %v263, %v264
    %v266 = vshll.u32 2102212464, %v254
    %v267 = vshrl.u32 920167782, %v255
    %v268 = vor.u32 %v266, %v267
    %v269 = vshll.u32 920167782, %v254
    %v270 = vshrl.u32 1326507024, %v255
    %v271 = vor.u32 %v269, %v270
    %vm272 = vcmp.lt.s32.totalorder %v253, 1
    %vm273 = vcmp.lt.s32.totalorder %v253, 2
    %vm274 = vcmp.lt.s32.totalorder %v253, 3
    %vm275 = vcmp.lt.s32.totalorder %v253, 4
    %v276 = vsel %vm272, %v256, %v259
    %v277 = vsel %vm275, %v265, 2102212464
    %v278 = vsel %vm274, %v262, %v277
    %v279 = vsel %vm273, %v276, %v278
    %v280 = vsel %vm272, %v259, %v262
    %v281 = vsel %vm275, %v268, 920167782
    %v282 = vsel %vm274, %v265, %v281
    %v283 = vsel %vm273, %v280, %v282
    %v284 = vsel %vm272, %v262, %v265
    %v285 = vsel %vm275, %v271, 1326507024
    %v286 = vsel %vm274, %v268, %v285
    %v287 = vsel %vm273, %v284, %v286
    %v288 = vshll.u32 %v248, 8
    %v289 = vmul.u32.u64.compose %v288, %v287
    %v290 = vextract.low.u32 %v289
    %v291 = vextract.high.u32 %v289
    %v292 = vmul.u32.u64.compose %v288, %v283
    %v293 = vextract.low.u32 %v292
    %v294 = vextract.high.u32 %v292
    %v295 = vmul.u32 %v288, %v279
    %v296 = vadd.s32 %v291, %v293
    %vm297 = vc.u32 %v291, %v293
    %v298 = vadd.s32 %v294, 1
    %v299 = vsel %vm297, %v298, %v294
    %v300 = vadd.s32 %v295, %v299
    %v301 = vadd.s32 %v300, 536870912
    %v302 = vshrl.u32 %v301, 30
    %v303 = vshll.u32 %v302, 30
    %v304 = vsub.s32 %v300, %v303
    %vm305 = vcmp.lt.s32.totalorder %v304, 0
    %v306 = vsub.s32 0, %v304
    %v307 = vsel %vm305, %v306, %v304
    %v308 = vclz %v307
    %v309 = vsub.s32 %v308, 2
    %vm310 = vcmp.gt.s32.totalorder 0, %v309
    %v311 = vsel %vm310, 0, %v309
    %v312 = vsub.s32 32, %v311
    %v313 = vshll.u32 %v304, %v311
    %v314 = vshrl.u32 %v296, %v312
    %v315 = vor.u32 %v313, %v314
    %v316 = vsub.s32 4294967266, %v311
    %v317 = vadd.s32 %v316, 127
    %v318 = vshll.u32 %v317, 23
    %v319 = vor.u32 4788187, %v318
    %v320 = vand.u32 2147483647, %v319
    %v322 = vcvt.s32.f32 %v315
    %v323 = vmul.f32 %v322, %v320
    %v324 = vxor.u32 %v323, 2147483648
    %v325 = vsel %vm242, %v324, %v323
    %v326 = vsub.s32 4, %v302
    %v327 = vsel %vm242, %v326, %v302
    %v328 = vsel %vm241, %v32, %v325
    %v329 = vsel %vm241, 0, %v327
    %v330 = vcosq.f32.pop %v328
    %v331 = vsinq.f32.pop %v328
    %vm332 = vweird.f32 %v32
    %v333 = vand.u32 %v329, 3
    %vm334 = vcmp.lt.s32.totalorder %v333, 2
    %vm335 = vcmp.eq.s32.totalorder %v333, 0
    %v336 = vxor.u32 %v331, 2147483648
    %v337 = vsel %vm335, %v330, %v336
    %vm338 = vcmp.eq.s32.totalorder %v333, 2
    %v339 = vxor.u32 %v330, 2147483648
    %v340 = vsel %vm338, %v339, %v331
    %v341 = vsel %vm334, %v337, %v340
    %v342 = vsel %vm332, nan, %v341
    %v343 = vand.u32 2147483647, %v32
    %vm344 = vcmp.le.f32.partialorder %v343, 0.7853982
    %vm345 = vcmp.lt.s32.totalorder %v32, 0
    %v346 = vand.u32 %v32, 2139095040
    %v347 = vshrl.u32 %v346, 23
    %v348 = vsub.s32 %v347, 127
    %v349 = vand.u32 2147483647, %v32
    %v350 = vand.u32 %v349, 8388607
    %v351 = vor.u32 %v350, 8388608
    %v352 = vsub.s32 0, %v351
    %v353 = vadd.s32 %v348, 1
    %vm354 = vcmp.gt.s32.totalorder %v353, 0
    %v355 = vsel %vm354, %v353, 0
    %v356 = vshrl.u32 %v355, 5
    %v357 = vand.u32 %v355, 31
    %v358 = vsub.s32 32, %v357
    %v359 = vshrl.u32 683565275, %v358
    %v360 = vshll.u32 683565275, %v357
    %v361 = vshrl.u32 2475754826, %v358
    %v362 = vor.u32 %v360, %v361
    %v363 = vshll.u32 2475754826, %v357
    %v364 = vshrl.u32 2131351028, %v358
    %v365 = vor.u32 %v363, %v364
    %v366 = vshll.u32 2131351028, %v357
    %v367 = vshrl.u32 2102212464, %v358
    %v368 = vor.u32 %v366, %v367
    %v369 = vshll.u32 2102212464, %v357
    %v370 = vshrl.u32 920167782, %v358
    %v371 = vor.u32 %v369, %v370
    %v372 = vshll.u32 920167782, %v357
    %v373 = vshrl.u32 1326507024, %v358
    %v374 = vor.u32 %v372, %v373
    %vm375 = vcmp.lt.s32.totalorder %v356, 1
    %vm376 = vcmp.lt.s32.totalorder %v356, 2
    %vm377 = vcmp.lt.s32.totalorder %v356, 3
    %vm378 = vcmp.lt.s32.totalorder %v356, 4
    %v379 = vsel %vm375, %v359, %v362
    %v380 = vsel %vm378, %v368, 2102212464
    %v381 = vsel %vm377, %v365, %v380
    %v382 = vsel %vm376, %v379, %v381
    %v383 = vsel %vm375, %v362, %v365
    %v384 = vsel %vm378, %v371, 920167782
    %v385 = vsel %vm377, %v368, %v384
    %v386 = vsel %vm376, %v383, %v385
    %v387 = vsel %vm375, %v365, %v368
    %v388 = vsel %vm378, %v374, 1326507024
    %v389 = vsel %vm377, %v371, %v388
    %v390 = vsel %vm376, %v387, %v389
    %v391 = vshll.u32 %v351, 8
    %v392 = vmul.u32.u64.compose %v391, %v390
    %v393 = vextract.low.u32 %v392
    %v394 = vextract.high.u32 %v392
    %v395 = vmul.u32.u64.compose %v391, %v386
    %v396 = vextract.low.u32 %v395
    %v397 = vextract.high.u32 %v395
    %v398 = vmul.u32 %v391, %v382
    %v399 = vadd.s32 %v394, %v396
    %vm400 = vc.u32 %v394, %v396
    %v401 = vadd.s32 %v397, 1
    %v402 = vsel %vm400, %v401, %v397
    %v403 = vadd.s32 %v398, %v402
    %v404 = vadd.s32 %v403, 536870912
    %v405 = vshrl.u32 %v404, 30
    %v406 = vshll.u32 %v405, 30
    %v407 = vsub.s32 %v403, %v406
    %vm408 = vcmp.lt.s32.totalorder %v407, 0
    %v409 = vsub.s32 0, %v407
    %v410 = vsel %vm408, %v409, %v407
    %v411 = vclz %v410
    %v412 = vsub.s32 %v411, 2
    %vm413 = vcmp.gt.s32.totalorder 0, %v412
    %v414 = vsel %vm413, 0, %v412
    %v415 = vsub.s32 32, %v414
    %v416 = vshll.u32 %v407, %v414
    %v417 = vshrl.u32 %v399, %v415
    %v418 = vor.u32 %v416, %v417
    %v419 = vsub.s32 4294967266, %v414
    %v420 = vadd.s32 %v419, 127
    %v421 = vshll.u32 %v420, 23
    %v422 = vor.u32 4788187, %v421
    %v423 = vand.u32 2147483647, %v422
    %v425 = vcvt.s32.f32 %v418
    %v426 = vmul.f32 %v425, %v423
    %v427 = vxor.u32 %v426, 2147483648
    %v428 = vsel %vm345, %v427, %v426
    %v429 = vsub.s32 4, %v405
    %v430 = vsel %vm345, %v429, %v405
    %v431 = vsel %vm344, %v32, %v428
    %v432 = vsel %vm344, 0, %v430
    %v433 = vcosq.f32.pop %v431
    %v434 = vsinq.f32.pop %v431
    %vm435 = vweird.f32 %v32
    %v436 = vadd.s32 %v432, 3
    %v437 = vand.u32 %v436, 3
    %vm438 = vcmp.lt.s32.totalorder %v437, 2
    %vm439 = vcmp.eq.s32.totalorder %v437, 0
    %v440 = vxor.u32 %v434, 2147483648
    %v441 = vsel %vm439, %v433, %v440
    %vm442 = vcmp.eq.s32.totalorder %v437, 2
    %v443 = vxor.u32 %v433, 2147483648
    %v444 = vsel %vm442, %v443, %v434
    %v445 = vsel %vm438, %v441, %v444
    %v446 = vsel %vm435, nan, %v445
    %v447 = vmul.f32 %v20, 4.0
    %v448 = vmul.f32 %v447, %v20
    %v449 = vmul.f32 %v448, %v28
    %v450 = vmul.f32 %v23, %v23
    %v451 = vmul.f32 %v450, %v28
    %v452 = vmul.f32 %v449, %v135
    %v453 = vmul.f32 %v449, %v239
    %v454 = vmul.f32 %v451, %v342
    %v455 = vmul.f32 %v451, %v446
    %v456 = vld [vmem:[%s1] sm:$0xf]
    %458 = vset.pattern.permute.xlu0 0
    %459 = vperm.xlu0 %458, %v456
    %v460 = vpop.permute.xlu0 %459
    %v463 = vlaneseq
    %v464 = vshrl.u32 %v463, 7
    %v465 = vsub.s32 0, %v464
    %v466 = vrot.slane %v452, %v465
    %v467 = vlaneseq
    %v468 = vshrl.u32 %v467, 7
    %v469 = vsub.s32 1, %v468
    %v470 = vrot.slane %v452, %v469
    %v473 = vmul.f32 %v460, %v466
    %v474 = vmul.f32 %v460, %v470
    %475 = vset.pattern.permute.xlu0 1
    %476 = vperm.xlu0 %475, %v456
    %v477 = vpop.permute.xlu0 %476
    %v480 = vlaneseq
    %v481 = vshrl.u32 %v480, 7
    %v482 = vsub.s32 0, %v481
    %v483 = vrot.slane %v453, %v482
    %v484 = vlaneseq
    %v485 = vshrl.u32 %v484, 7
    %v486 = vsub.s32 1, %v485
    %v487 = vrot.slane %v453, %v486
    %v490 = vmul.f32 %v477, %v483
    %v491 = vmul.f32 %v477, %v487
    %v492 = vadd.f32 %v473, %v490
    %v493 = vadd.f32 %v474, %v491
    %494 = vset.pattern.permute.xlu0 2
    %495 = vperm.xlu0 %494, %v456
    %v496 = vpop.permute.xlu0 %495
    %v499 = vlaneseq
    %v500 = vshrl.u32 %v499, 7
    %v501 = vsub.s32 0, %v500
    %v502 = vrot.slane %v454, %v501
    %v503 = vlaneseq
    %v504 = vshrl.u32 %v503, 7
    %v505 = vsub.s32 1, %v504
    %v506 = vrot.slane %v454, %v505
    %v509 = vmul.f32 %v496, %v502
    %v510 = vmul.f32 %v496, %v506
    %v511 = vadd.f32 %v492, %v509
    %v512 = vadd.f32 %v493, %v510
    %513 = vset.pattern.permute.xlu0 3
    %514 = vperm.xlu0 %513, %v456
    %v515 = vpop.permute.xlu0 %514
    %v518 = vlaneseq
    %v519 = vshrl.u32 %v518, 7
    %v520 = vsub.s32 0, %v519
    %v521 = vrot.slane %v455, %v520
    %v522 = vlaneseq
    %v523 = vshrl.u32 %v522, 7
    %v524 = vsub.s32 1, %v523
    %v525 = vrot.slane %v455, %v524
    %v528 = vmul.f32 %v515, %v521
    %v529 = vmul.f32 %v515, %v525
    %v530 = vadd.f32 %v511, %v528
    %v531 = vadd.f32 %v512, %v529
    %532 = vset.pattern.permute.xlu0 4
    %533 = vperm.xlu0 %532, %v456
    %v534 = vpop.permute.xlu0 %533
    %v537 = vlaneseq
    %v538 = vshrl.u32 %v537, 7
    %v539 = vsub.s32 0, %v538
    %v540 = vrot.slane %v28, %v539
    %v541 = vlaneseq
    %v542 = vshrl.u32 %v541, 7
    %v543 = vsub.s32 1, %v542
    %v544 = vrot.slane %v28, %v543
    %v547 = vmul.f32 %v534, %v540
    %v548 = vmul.f32 %v534, %v544
    %v549 = vadd.f32 %v530, %v547
    %v550 = vadd.f32 %v531, %v548
    %551 = vst [vmem:[%s2] sm:$0xf] %v549
    %552 = vst [vmem:[%s2 + $0x8] sm:$0xf] %v550
    %v553 = vlaneseq
    %v554 = vand.u32 %v553, 127
    %v555 = vadd.s32 %v554, 128
    %v556 = vshra.s32 %v554, 4
    %v557 = vshra.s32 %v555, 4
    %v558 = vand.u32 %v554, 15
    %v559 = vand.u32 %v555, 15
    %vm560 = vcmp.ge.s32.totalorder %v556, 1
    %vm561 = vcmp.ge.s32.totalorder %v557, 1
    %vm562 = vcmp.le.s32.totalorder %v556, 14
    %vm563 = vcmp.le.s32.totalorder %v557, 14
    %vm564 = vcmp.ge.s32.totalorder %v558, 1
    %vm565 = vcmp.ge.s32.totalorder %v559, 1
    %vm566 = vcmp.le.s32.totalorder %v558, 14
    %vm567 = vcmp.le.s32.totalorder %v559, 14
    %568 = vrot.lane.b32.xlu0 %v549, 17
    %v569 = vpop.permute.xlu0 %568
    %570 = vrot.lane.b32.xlu0 %v550, 17
    %v571 = vpop.permute.xlu0 %570
    %vm572 = vcmp.lt.s32.totalorder %v554, 17
    %v573 = vsel %vm572, %v569, %v571
    %v574 = vsel %vm572, %v571, %v569
    %vm575 = vmand %vm560, %vm564
    %vm576 = vmand %vm561, %vm565
    %v577 = vsel %vm575, 1, 0
    %v578 = vsel %vm576, 1, 0
    %vm579 = vcmp.eq.s32.totalorder %v577, 1
    %vm580 = vcmp.eq.s32.totalorder %v578, 1
    %v581 = vsel %vm579, %v574, 0.0
    %v582 = vsel %vm580, %v573, 0.0
    %583 = vset.pattern.permute.xlu0 6
    %584 = vperm.xlu0 %583, %v456
    %v585 = vpop.permute.xlu0 %584
    %v587 = vmul.f32 %v585, %v581
    %v588 = vmul.f32 %v585, %v582
    %589 = vrot.lane.b32.xlu0 %v549, 16
    %v590 = vpop.permute.xlu0 %589
    %591 = vrot.lane.b32.xlu0 %v550, 16
    %v592 = vpop.permute.xlu0 %591
    %vm593 = vcmp.lt.s32.totalorder %v554, 16
    %v594 = vsel %vm593, %v590, %v592
    %v595 = vsel %vm593, %v592, %v590
    %v596 = vsel %vm560, 1, 0
    %v597 = vsel %vm561, 1, 0
    %vm598 = vcmp.eq.s32.totalorder %v596, 1
    %vm599 = vcmp.eq.s32.totalorder %v597, 1
    %v600 = vsel %vm598, %v595, 0.0
    %v601 = vsel %vm599, %v594, 0.0
    %602 = vset.pattern.permute.xlu0 7
    %603 = vperm.xlu0 %602, %v456
    %v604 = vpop.permute.xlu0 %603
    %v606 = vmul.f32 %v604, %v600
    %v607 = vmul.f32 %v604, %v601
    %v608 = vadd.f32 %v587, %v606
    %v609 = vadd.f32 %v588, %v607
    %610 = vrot.lane.b32.xlu0 %v549, 15
    %v611 = vpop.permute.xlu0 %610
    %612 = vrot.lane.b32.xlu0 %v550, 15
    %v613 = vpop.permute.xlu0 %612
    %vm614 = vcmp.lt.s32.totalorder %v554, 15
    %v615 = vsel %vm614, %v611, %v613
    %v616 = vsel %vm614, %v613, %v611
    %vm617 = vmand %vm560, %vm566
    %vm618 = vmand %vm561, %vm567
    %v619 = vsel %vm617, 1, 0
    %v620 = vsel %vm618, 1, 0
    %vm621 = vcmp.eq.s32.totalorder %v619, 1
    %vm622 = vcmp.eq.s32.totalorder %v620, 1
    %v623 = vsel %vm621, %v616, 0.0
    %v624 = vsel %vm622, %v615, 0.0
    %625 = vset.pattern.permute.xlu0 8
    %626 = vperm.xlu0 %625, %v456
    %v627 = vpop.permute.xlu0 %626
    %v629 = vmul.f32 %v627, %v623
    %v630 = vmul.f32 %v627, %v624
    %v631 = vadd.f32 %v608, %v629
    %v632 = vadd.f32 %v609, %v630
    %633 = vrot.lane.b32.xlu0 %v549, 1
    %v634 = vpop.permute.xlu0 %633
    %635 = vrot.lane.b32.xlu0 %v550, 1
    %v636 = vpop.permute.xlu0 %635
    %vm637 = vcmp.lt.s32.totalorder %v554, 1
    %v638 = vsel %vm637, %v634, %v636
    %v639 = vsel %vm637, %v636, %v634
    %v640 = vsel %vm564, 1, 0
    %v641 = vsel %vm565, 1, 0
    %vm642 = vcmp.eq.s32.totalorder %v640, 1
    %vm643 = vcmp.eq.s32.totalorder %v641, 1
    %v644 = vsel %vm642, %v639, 0.0
    %v645 = vsel %vm643, %v638, 0.0
    %646 = vset.pattern.permute.xlu0 9
    %647 = vperm.xlu0 %646, %v456
    %v648 = vpop.permute.xlu0 %647
    %v650 = vmul.f32 %v648, %v644
    %v651 = vmul.f32 %v648, %v645
    %v652 = vadd.f32 %v631, %v650
    %v653 = vadd.f32 %v632, %v651
    %654 = vset.pattern.permute.xlu0 10
    %655 = vperm.xlu0 %654, %v456
    %v656 = vpop.permute.xlu0 %655
    %v658 = vmul.f32 %v656, %v549
    %v659 = vmul.f32 %v656, %v550
    %v660 = vadd.f32 %v652, %v658
    %v661 = vadd.f32 %v653, %v659
    %662 = vrot.lane.b32.xlu0 %v549, 127
    %v663 = vpop.permute.xlu0 %662
    %664 = vrot.lane.b32.xlu0 %v550, 127
    %v665 = vpop.permute.xlu0 %664
    %vm666 = vcmp.lt.s32.totalorder %v554, 127
    %v667 = vsel %vm666, %v663, %v665
    %v668 = vsel %vm666, %v665, %v663
    %v669 = vsel %vm566, 1, 0
    %v670 = vsel %vm567, 1, 0
    %vm671 = vcmp.eq.s32.totalorder %v669, 1
    %vm672 = vcmp.eq.s32.totalorder %v670, 1
    %v673 = vsel %vm671, %v667, 0.0
    %v674 = vsel %vm672, %v668, 0.0
    %675 = vset.pattern.permute.xlu0 11
    %676 = vperm.xlu0 %675, %v456
    %v677 = vpop.permute.xlu0 %676
    %v679 = vmul.f32 %v677, %v673
    %v680 = vmul.f32 %v677, %v674
    %v681 = vadd.f32 %v660, %v679
    %v682 = vadd.f32 %v661, %v680
    %683 = vrot.lane.b32.xlu0 %v549, 113
    %v684 = vpop.permute.xlu0 %683
    %685 = vrot.lane.b32.xlu0 %v550, 113
    %v686 = vpop.permute.xlu0 %685
    %vm687 = vcmp.lt.s32.totalorder %v554, 113
    %v688 = vsel %vm687, %v684, %v686
    %v689 = vsel %vm687, %v686, %v684
    %vm690 = vmand %vm562, %vm564
    %vm691 = vmand %vm563, %vm565
    %v692 = vsel %vm690, 1, 0
    %v693 = vsel %vm691, 1, 0
    %vm694 = vcmp.eq.s32.totalorder %v692, 1
    %vm695 = vcmp.eq.s32.totalorder %v693, 1
    %v696 = vsel %vm694, %v688, 0.0
    %v697 = vsel %vm695, %v689, 0.0
    %698 = vset.pattern.permute.xlu0 12
    %699 = vperm.xlu0 %698, %v456
    %v700 = vpop.permute.xlu0 %699
    %v702 = vmul.f32 %v700, %v696
    %v703 = vmul.f32 %v700, %v697
    %v704 = vadd.f32 %v681, %v702
    %v705 = vadd.f32 %v682, %v703
    %706 = vrot.lane.b32.xlu0 %v549, 112
    %v707 = vpop.permute.xlu0 %706
    %708 = vrot.lane.b32.xlu0 %v550, 112
    %v709 = vpop.permute.xlu0 %708
    %vm710 = vcmp.lt.s32.totalorder %v554, 112
    %v711 = vsel %vm710, %v707, %v709
    %v712 = vsel %vm710, %v709, %v707
    %v713 = vsel %vm562, 1, 0
    %v714 = vsel %vm563, 1, 0
    %vm715 = vcmp.eq.s32.totalorder %v713, 1
    %vm716 = vcmp.eq.s32.totalorder %v714, 1
    %v717 = vsel %vm715, %v711, 0.0
    %v718 = vsel %vm716, %v712, 0.0
    %719 = vset.pattern.permute.xlu0 13
    %720 = vperm.xlu0 %719, %v456
    %v721 = vpop.permute.xlu0 %720
    %v723 = vmul.f32 %v721, %v717
    %v724 = vmul.f32 %v721, %v718
    %v725 = vadd.f32 %v704, %v723
    %v726 = vadd.f32 %v705, %v724
    %727 = vrot.lane.b32.xlu0 %v549, 111
    %v728 = vpop.permute.xlu0 %727
    %729 = vrot.lane.b32.xlu0 %v550, 111
    %v730 = vpop.permute.xlu0 %729
    %vm731 = vcmp.lt.s32.totalorder %v554, 111
    %v732 = vsel %vm731, %v728, %v730
    %v733 = vsel %vm731, %v730, %v728
    %vm734 = vmand %vm562, %vm566
    %vm735 = vmand %vm563, %vm567
    %v736 = vsel %vm734, 1, 0
    %v737 = vsel %vm735, 1, 0
    %vm738 = vcmp.eq.s32.totalorder %v736, 1
    %vm739 = vcmp.eq.s32.totalorder %v737, 1
    %v740 = vsel %vm738, %v732, 0.0
    %v741 = vsel %vm739, %v733, 0.0
    %742 = vset.pattern.permute.xlu0 14
    %743 = vperm.xlu0 %742, %v456
    %v744 = vpop.permute.xlu0 %743
    %v746 = vmul.f32 %v744, %v740
    %v747 = vmul.f32 %v744, %v741
    %v748 = vadd.f32 %v725, %v746
    %v749 = vadd.f32 %v726, %v747
    %750 = vset.pattern.permute.xlu0 5
    %751 = vperm.xlu0 %750, %v456
    %v752 = vpop.permute.xlu0 %751
    %v754 = vadd.f32 %v748, %v752
    %v755 = vadd.f32 %v749, %v752
    %v758 = vrot.slane %v754, 4
    %v759 = vrot.slane %v755, 4
    %762 = vst [vmem:[%s2] sm:$0xf0] %v758
    %763 = vst [vmem:[%s2 + $0x8] sm:$0xf0] %v759
    %v764 = vsub.f32 %v754, %v14
    %v765 = vsub.f32 %v755, %v15
    %v766 = vmul.f32 %v764, %v764
    %v767 = vmul.f32 %v765, %v765
    %vm768 = vcmask 1043456
    %v769 = vsel %vm768, %v766, 0.0
    %v770 = vsel %vm768, %v767, 0.0
    %v771 = vadd.f32 %v769, %v770
    %772 = vadd.xlane.f32.xlu0 %v771
    %v773 = vpop.xlane.xlu0 %772
    %v774 = vrot.slane %v773, 4
    %v775 = vadd.f32 %v773, %v774
    %v776 = vrot.slane %v775, 2
    %v777 = vadd.f32 %v775, %v776
    %v778 = vrot.slane %v777, 1
    %v779 = vadd.f32 %v777, %v778
    %s780 = vtos %v779
    %s781 = scalar_lea.smem [#allocation2], 0
    %782 = sst [smem:[%s781]] %s780
    %v783 = vand.u32 2147483647, %v549
    %v784 = vand.u32 2147483647, %v550
    %v785 = vsel %vm768, %v783, 0.0
    %v786 = vsel %vm768, %v784, 0.0
    %v787 = vadd.f32 %v785, %v786
    %788 = vadd.xlane.f32.xlu0 %v787
    %v789 = vpop.xlane.xlu0 %788
    %v790 = vrot.slane %v789, 4
    %v791 = vadd.f32 %v789, %v790
    %v792 = vrot.slane %v791, 2
    %v793 = vadd.f32 %v791, %v792
    %v794 = vrot.slane %v793, 1
    %v795 = vadd.f32 %v793, %v794
    %s796 = vtos %v795
    %s797 = scalar_lea.smem [#allocation2], 1
    %798 = sst [smem:[%s797]] %s796
    // Predicated region
    $region10: #{lsfpom_forward.1} parent=1 // pred_check
      _
    $region11: #{lsfpom_forward.1} parent=1 // pred_check_branch
      %800 = sbr.rel (0) target = $region13
    $region12: #{lsfpom_forward.1} parent=1 // pred_region
      _
    $region13: #{lsfpom_forward.1} parent=1 // pred_fallthru
      _
    // Predicated region
    $region14: #{lsfpom_forward.1} parent=1 // pred_check
      _
    $region15: #{lsfpom_forward.1} parent=1 // pred_check_branch
      %802 = sbr.rel (0) target = $region17
    $region16: #{lsfpom_forward.1} parent=1 // pred_region
      %s804 = ssub.s32 16, 16
      %805 = vsyncadd [#allocation3], %s804
      %s807 = sshll.u32 %s3, 4
      %s808 = int_to_ptr.vmem [resolvable:$true] %s807
      %810 = dma.smem_to_vmem [#allocation2], 16, %s808, [#allocation3]
    $region17: #{lsfpom_forward.1} parent=1 // pred_fallthru
      _
    // Predicated region
    $region18: #{lsfpom_forward.1} parent=1 // pred_check
      _
    $region19: #{lsfpom_forward.1} parent=1 // pred_check_branch
      %812 = sbr.rel (0) target = $region21
    $region20: #{lsfpom_forward.1} parent=1 // pred_region
      _
    $region21: #{lsfpom_forward.1} parent=1 // pred_fallthru
      _
    // Predicated region
    $region22: #{lsfpom_forward.1} parent=1 // pred_check
      _
    $region23: #{lsfpom_forward.1} parent=1 // pred_check_branch
      %814 = sbr.rel (0) target = $region25
    $region24: #{lsfpom_forward.1} parent=1 // pred_region
      %815 = dma.done [#allocation3], 16
    $region25: #{lsfpom_forward.1} parent=1 // pred_fallthru
      _
    %816 = sfence
    %817 = vsyncpa [#allocation3], 1

</llo_original>
